<compile_context>
chip_gen: v5e
topology: v5e:2x2
jax: 0.10.0
libtpu: 0.0.40
codegen_flags: <defaults>
</compile_context>

<pallas_src>
import functools
import math

import jax
import jax.numpy as jnp
from jax import lax
from jax.experimental import pallas as pl
from jax.experimental.pallas import tpu as pltpu

_MASK_VALUE = -0.7 * float(jnp.finfo(jnp.float32).max)
_VMEM_LIMIT = 64 * 1024 * 1024  # explicit scoped-VMEM budget (safe on v5e/v6e/v7x)


def _pick_tile(dim, candidates=(512, 256, 128)):
    """Largest candidate tile that evenly divides `dim`, else the full dim."""
    for c in candidates:
        if dim >= c and dim % c == 0:
            return c
    return dim


# --------------------------------------------------------------------------------------
# Tiled matmul (+ bias) kernel: used for the QKV projection and the output ("dense") proj.
# --------------------------------------------------------------------------------------
def _matmul_bias_kernel(x_ref, w_ref, b_ref, o_ref, acc_ref):
    @pl.when(pl.program_id(2) == 0)
    def _():
        acc_ref[...] = jnp.zeros_like(acc_ref)

    acc_ref[...] += jnp.dot(
        x_ref[...].astype(jnp.float32),
        w_ref[...].astype(jnp.float32),
        preferred_element_type=jnp.float32,
    )

    @pl.when(pl.program_id(2) == pl.num_programs(2) - 1)
    def _():
        o_ref[...] = (acc_ref[...] + b_ref[...].astype(jnp.float32)).astype(o_ref.dtype)


def matmul_bias(x, w, b, *, out_dtype=None):
    """x: (M, K), w: (K, N), b: (N,) -> (M, N)."""
    M, K = x.shape
    K2, N = w.shape
    assert K == K2
    out_dtype = out_dtype or x.dtype
    tm, tn, tk = _pick_tile(M), _pick_tile(N), _pick_tile(K)
    grid = (M // tm, N // tn, K // tk)

    return pl.pallas_call(
        _matmul_bias_kernel,
        out_shape=jax.ShapeDtypeStruct((M, N), out_dtype),
        grid_spec=pltpu.PrefetchScalarGridSpec(
            num_scalar_prefetch=0,
            grid=grid,
            in_specs=[
                pl.BlockSpec((tm, tk), lambda i, j, k: (i, k)),
                pl.BlockSpec((tk, tn), lambda i, j, k: (k, j)),
                pl.BlockSpec((1, tn), lambda i, j, k: (0, j)),
            ],
            out_specs=pl.BlockSpec((tm, tn), lambda i, j, k: (i, j)),
            scratch_shapes=[pltpu.VMEM((tm, tn), jnp.float32)],
        ),
        compiler_params=pltpu.CompilerParams(
            dimension_semantics=("parallel", "parallel", "arbitrary"),
            vmem_limit_bytes=_VMEM_LIMIT,
        ),
    )(x, w, b.reshape(1, N))


# --------------------------------------------------------------------------------------
# Flash-attention (online softmax) kernel with causal masking.
# Inputs are laid out (B*H, S, D); head_dim D is kept full in the lane axis.
# --------------------------------------------------------------------------------------
def _flash_attn_kernel(q_ref, k_ref, v_ref, o_ref, m_sc, l_sc, acc_sc,
                       *, scale, tq, tk, causal):
    qi = pl.program_id(1)
    ki = pl.program_id(2)

    @pl.when(ki == 0)
    def _():
        m_sc[...] = jnp.full_like(m_sc, -jnp.inf)
        l_sc[...] = jnp.zeros_like(l_sc)
        acc_sc[...] = jnp.zeros_like(acc_sc)

    def compute():
        q = q_ref[0].astype(jnp.float32) * scale                      # (tq, D)
        k = k_ref[0].astype(jnp.float32)                              # (tk, D)
        s = lax.dot_general(q, k, (((1,), (1,)), ((), ())),
                            preferred_element_type=jnp.float32)       # (tq, tk)
        if causal:
            q_idx = qi * tq + lax.broadcasted_iota(jnp.int32, (tq, tk), 0)
            k_idx = ki * tk + lax.broadcasted_iota(jnp.int32, (tq, tk), 1)
            s = jnp.where(q_idx >= k_idx, s, _MASK_VALUE)

        m_prev = m_sc[...]                                            # (tq, 1)
        m_new = jnp.maximum(m_prev, s.max(axis=-1, keepdims=True))
        alpha = jnp.exp(m_prev - m_new)
        p = jnp.exp(s - m_new)
        l_sc[...] = alpha * l_sc[...] + p.sum(axis=-1, keepdims=True)
        acc_sc[...] = alpha * acc_sc[...] + jnp.dot(
            p, v_ref[0].astype(jnp.float32), preferred_element_type=jnp.float32)
        m_sc[...] = m_new

    if causal:
        # Skip KV blocks that lie entirely above the diagonal for this query block.
        @pl.when((qi + 1) * tq > ki * tk)
        def _():
            compute()
    else:
        compute()

    @pl.when(ki == pl.num_programs(2) - 1)
    def _():
        o_ref[0] = (acc_sc[...] / l_sc[...]).astype(o_ref.dtype)


def flash_attention(q, k, v, *, scale, causal=True):
    """q, k, v: (BH, S, D) -> (BH, S, D)."""
    BH, S, D = q.shape
    tq = _pick_tile(S, (256, 128))
    tk = _pick_tile(S, (256, 128))
    grid = (BH, S // tq, S // tk)

    kernel = functools.partial(_flash_attn_kernel, scale=scale, tq=tq, tk=tk,
                               causal=causal)
    return pl.pallas_call(
        kernel,
        out_shape=jax.ShapeDtypeStruct((BH, S, D), q.dtype),
        grid_spec=pltpu.PrefetchScalarGridSpec(
            num_scalar_prefetch=0,
            grid=grid,
            in_specs=[
                pl.BlockSpec((1, tq, D), lambda b, qi, ki: (b, qi, 0)),
                pl.BlockSpec((1, tk, D), lambda b, qi, ki: (b, ki, 0)),
                pl.BlockSpec((1, tk, D), lambda b, qi, ki: (b, ki, 0)),
            ],
            out_specs=pl.BlockSpec((1, tq, D), lambda b, qi, ki: (b, qi, 0)),
            scratch_shapes=[
                pltpu.VMEM((tq, 1), jnp.float32),   # running max
                pltpu.VMEM((tq, 1), jnp.float32),   # running denom
                pltpu.VMEM((tq, D), jnp.float32),   # output accumulator
            ],
        ),
        compiler_params=pltpu.CompilerParams(
            dimension_semantics=("parallel", "parallel", "arbitrary"),
            vmem_limit_bytes=_VMEM_LIMIT,
        ),
    )(q, k, v)


# --------------------------------------------------------------------------------------
# Full ParallelSelfAttention forward (world_size=1, no GQA, causal, inference).
# --------------------------------------------------------------------------------------
def parallel_self_attention_forward(hidden_states, params, *, num_heads):
    """hidden_states: (s, b, h). Returns (output [s,b,h], bias [h])."""
    s, b, h = hidden_states.shape
    hd = h // num_heads
    rows = s * b
    x2 = hidden_states.reshape(rows, h)

    # 1) QKV projection (ColumnParallelLinear with bias)
    mixed = matmul_bias(x2, params["w_qkv"], params["b_qkv"])          # (rows, 3h)

    # 2) split per-head q/k/v exactly as megatron: [s,b,nh,3*hd] -> 3 x [s,b,nh,hd]
    mixed = mixed.reshape(s, b, num_heads, 3 * hd)
    q, k, v = jnp.split(mixed, 3, axis=-1)

    def to_bh(t):  # [s,b,nh,hd] -> [b*nh, s, hd]
        return t.transpose(1, 2, 0, 3).reshape(b * num_heads, s, hd)

    qb, kb, vb = to_bh(q), to_bh(k), to_bh(v)

    # 3) scaled causal attention (norm_factor = sqrt(head_dim))
    scale = 1.0 / math.sqrt(hd)
    ctx = flash_attention(qb, kb, vb, scale=scale, causal=True)        # (b*nh, s, hd)

    # 4) [b*nh,s,hd] -> [s,b,h], then dense (RowParallelLinear, skip_bias_add=True)
    ctx = ctx.reshape(b, num_heads, s, hd).transpose(2, 0, 1, 3).reshape(rows, h)
    zero_bias = jnp.zeros((h,), dtype=ctx.dtype)                       # skip_bias_add
    out = matmul_bias(ctx, params["w_dense"], zero_bias).reshape(s, b, h)
    return out, params["b_dense"]


# --------------------------------------------------------------------------------------
# Pure-JAX reference for correctness checking.
# --------------------------------------------------------------------------------------
def _reference_forward(hidden_states, params, *, num_heads):
    s, b, h = hidden_states.shape
    hd = h // num_heads
    x2 = hidden_states.reshape(s * b, h)
    mixed = (x2 @ params["w_qkv"] + params["b_qkv"]).reshape(s, b, num_heads, 3 * hd)
    q, k, v = jnp.split(mixed, 3, axis=-1)
    q = q.transpose(1, 2, 0, 3)  # (b, nh, s, hd)
    k = k.transpose(1, 2, 0, 3)
    v = v.transpose(1, 2, 0, 3)
    scores = jnp.einsum("bhqd,bhkd->bhqk", q, k) / math.sqrt(hd)
    mask = jnp.tril(jnp.ones((s, s), dtype=bool))
    scores = jnp.where(mask, scores, -jnp.inf)
    probs = jax.nn.softmax(scores, axis=-1)
    ctx = jnp.einsum("bhqk,bhkd->bhqd", probs, v)
    ctx = ctx.transpose(2, 0, 1, 3).reshape(s * b, h)
    out = (ctx @ params["w_dense"]).reshape(s, b, h)
    return out, params["b_dense"]


if __name__ == "__main__":
    # Small shapes consistent with the module: [s, b, h] = [8, 2, 32], 4 heads (hd=8).
    seq, batch, hidden, num_heads = 8, 2, 32, 4

    key = jax.random.PRNGKey(0)
    k_x, k_wqkv, k_bqkv, k_wd, k_bd = jax.random.split(key, 5)

    hidden_states = jax.random.normal(k_x, (seq, batch, hidden), dtype=jnp.float32)
    params = {
        # weights stored as [in, out] (transposed vs. torch Linear) for direct matmul
        "w_qkv": 0.05 * jax.random.normal(k_wqkv, (hidden, 3 * hidden), jnp.float32),
        "b_qkv": 0.05 * jax.random.normal(k_bqkv, (3 * hidden,), jnp.float32),
        "w_dense": 0.05 * jax.random.normal(k_wd, (hidden, hidden), jnp.float32),
        "b_dense": 0.05 * jax.random.normal(k_bd, (hidden,), jnp.float32),
    }

    out, bias = parallel_self_attention_forward(hidden_states, params,
                                                num_heads=num_heads)
    out = jax.block_until_ready(out)

    ref_out, ref_bias = _reference_forward(hidden_states, params, num_heads=num_heads)
    assert jnp.allclose(out, ref_out, atol=2e-3, rtol=2e-3), "output mismatch vs reference"
    assert jnp.allclose(bias, ref_bias), "bias mismatch vs reference"

    print("KERNEL_OK")
</pallas_src>

<mosaic_0001>
module attributes {stable_mosaic.version = 11 : i64} {
  func.func @_matmul_bias_kernel(%arg0: i32, %arg1: i32, %arg2: i32, %arg3: memref<16x32xf32, #tpu.memory_space<vmem>>, %arg4: memref<32x96xf32, #tpu.memory_space<vmem>>, %arg5: memref<1x96xf32, #tpu.memory_space<vmem>>, %arg6: memref<16x96xf32, #tpu.memory_space<vmem>>, %arg7: memref<16x96xf32, #tpu.memory_space<vmem>>) attributes {dimension_semantics = [#tpu.dimension_semantics<parallel>, #tpu.dimension_semantics<parallel>, #tpu.dimension_semantics<arbitrary>], iteration_bounds = array<i64: 1, 1, 1>, scalar_prefetch = 0 : i64, scratch_operands = 1 : i64, tpu.core_type = #tpu.core_type<tc>, window_params = [{transform_indices = @transform_0, window_bounds = array<i64: 16, 32>}, {transform_indices = @transform_1, window_bounds = array<i64: 32, 96>}, {transform_indices = @transform_2, window_bounds = array<i64: 1, 96>}, {transform_indices = @transform_3, window_bounds = array<i64: 16, 96>}]} {
    %c0_i32 = arith.constant 0 : i32
    %0 = arith.cmpi eq, %arg2, %c0_i32 : i32
    %1 = arith.extui %0 : i1 to i32
    %c0_i32_0 = arith.constant 0 : i32
    %2 = arith.cmpi ne, %1, %c0_i32_0 : i32
    scf.if %2 {
      %cst_10 = arith.constant 0.000000e+00 : f32
      %12 = vector.broadcast %cst_10 : f32 to vector<16x96xf32>
      %c0_11 = arith.constant 0 : index
      %c0_12 = arith.constant 0 : index
      %13 = vector.load %arg7[%c0_11, %c0_12] : memref<16x96xf32, #tpu.memory_space<vmem>>, vector<16x96xf32>
      tpu.vector_store %arg7[%c0_11, %c0_12], %12 {strides = array<i32>} : memref<16x96xf32, #tpu.memory_space<vmem>>, vector<16x96xf32>,
    } else {
    }
    %c0 = arith.constant 0 : index
    %c0_1 = arith.constant 0 : index
    %3 = vector.load %arg7[%c0, %c0_1] : memref<16x96xf32, #tpu.memory_space<vmem>>, vector<16x96xf32>
    %c0_2 = arith.constant 0 : index
    %c0_3 = arith.constant 0 : index
    %4 = vector.load %arg3[%c0_2, %c0_3] : memref<16x32xf32, #tpu.memory_space<vmem>>, vector<16x32xf32>
    %c0_4 = arith.constant 0 : index
    %c0_5 = arith.constant 0 : index
    %5 = vector.load %arg4[%c0_4, %c0_5] : memref<32x96xf32, #tpu.memory_space<vmem>>, vector<32x96xf32>
    %cst = arith.constant dense<0.000000e+00> : vector<16x96xf32>
    %6 = tpu.matmul %4, %5, %cst {dimension_numbers = #tpu.dot_dimension_numbers<[1], [0], [0], [1], [0, 0, 1, 1], [], []>} : vector<16x32xf32>, vector<32x96xf32>, vector<16x96xf32> -> vector<16x96xf32>
    %7 = arith.addf %3, %6 : vector<16x96xf32>
    %c0_6 = arith.constant 0 : index
    %c0_7 = arith.constant 0 : index
    %8 = vector.load %arg7[%c0_6, %c0_7] : memref<16x96xf32, #tpu.memory_space<vmem>>, vector<16x96xf32>
    tpu.vector_store %arg7[%c0_6, %c0_7], %7 {strides = array<i32>} : memref<16x96xf32, #tpu.memory_space<vmem>>, vector<16x96xf32>,
    %c0_i32_8 = arith.constant 0 : i32
    %9 = arith.cmpi eq, %arg2, %c0_i32_8 : i32
    %10 = arith.extui %9 : i1 to i32
    %c0_i32_9 = arith.constant 0 : i32
    %11 = arith.cmpi ne, %10, %c0_i32_9 : i32
    scf.if %11 {
      %c0_10 = arith.constant 0 : index
      %c0_11 = arith.constant 0 : index
      %12 = vector.load %arg7[%c0_10, %c0_11] : memref<16x96xf32, #tpu.memory_space<vmem>>, vector<16x96xf32>
      %c0_12 = arith.constant 0 : index
      %c0_13 = arith.constant 0 : index
      %13 = vector.load %arg5[%c0_12, %c0_13] : memref<1x96xf32, #tpu.memory_space<vmem>>, vector<1x96xf32>
      %14 = vector.broadcast %13 : vector<1x96xf32> to vector<16x96xf32>
      %15 = arith.addf %12, %14 : vector<16x96xf32>
      %c0_14 = arith.constant 0 : index
      %c0_15 = arith.constant 0 : index
      %16 = vector.load %arg6[%c0_14, %c0_15] : memref<16x96xf32, #tpu.memory_space<vmem>>, vector<16x96xf32>
      tpu.vector_store %arg6[%c0_14, %c0_15], %15 {strides = array<i32>} : memref<16x96xf32, #tpu.memory_space<vmem>>, vector<16x96xf32>,
    } else {
    }
    return
  }
  func.func @transform_0(%arg0: i32, %arg1: i32, %arg2: i32) -> (i32, i32) {
    %c0_i32 = arith.constant 0 : i32
    return %arg0, %arg2 : i32, i32
  }
  func.func @transform_1(%arg0: i32, %arg1: i32, %arg2: i32) -> (i32, i32) {
    %c0_i32 = arith.constant 0 : i32
    return %arg2, %arg1 : i32, i32
  }
  func.func @transform_2(%arg0: i32, %arg1: i32, %arg2: i32) -> (i32, i32) {
    %c0_i32 = arith.constant 0 : i32
    %c0_i32_0 = arith.constant 0 : i32
    return %c0_i32, %arg1 : i32, i32
  }
  func.func @transform_3(%arg0: i32, %arg1: i32, %arg2: i32) -> (i32, i32) {
    %c0_i32 = arith.constant 0 : i32
    return %arg0, %arg1 : i32, i32
  }
}

</mosaic_0001>

<llo_original>
// kernel: tpu_custom_call.1
$region0: #{tpu_custom_call.1}
  #allocation0 [shape = 'u32[]', space=smem, size = 0x4, offset = 0x4, fixed_abs, tag = 'smem constant byte address 0x4 - core index']
  #allocation1 [shape = 'u32[72,128]{1,0:T(1,128)}', space=vmem, size = 0x9000, scoped, tag = 'internal scratch']
  #allocation2 [shape = 'f32[16,96]{1,0:T(8,128)}', space=vmem, size = 0x2000, scoped, tag = 'scratch operand']
  %s0 = inlined_call_operand.hbm [shape: f32[16,32], index: 0, kind: input, shape index: {}]
  %s1 = inlined_call_operand.hbm [shape: f32[32,96], index: 1, kind: input, shape index: {}]
  %s2 = inlined_call_operand.vmem [shape: f32[1,96], index: 2, kind: input, shape index: {}]
  %s3 = inlined_call_operand.hbm [shape: f32[16,96], index: 3, kind: output, shape index: {}]
  %s4 = sld [smem:[#allocation0]]
  $region38: #{tpu_custom_call.1} parent=0
    _
  %s6 = ssub.s32 1, %s4
  %s7 = scalar_select 0, %s6, %s4
  $region1: #{tpu_custom_call.1} parent=0
    #allocation3 [shape = 'u8[8192]{0}', space=vmem, size = 0x2000, scoped, tag = 'input window, operand 0, single buffered']
    #allocation4 [shape = 's32[1]{0}', space=sflag, size = 0x4, scoped, tag = 'scoped memory for tpu_custom_call.1']
    #allocation5 [shape = 's32[1]{0}', space=sflag, size = 0x4, scoped, tag = 'scoped memory for tpu_custom_call.1']
    #allocation6 [shape = 'u8[16384]{0}', space=vmem, size = 0x4000, scoped, tag = 'input window, operand 1, single buffered']
    #allocation7 [shape = 's32[1]{0}', space=sflag, size = 0x4, scoped, tag = 'scoped memory for tpu_custom_call.1']
    #allocation8 [shape = 'u8[8192]{0}', space=vmem, size = 0x2000, scoped, tag = 'output window, operand 0, single buffered']
    %8 = vsyncpa [#allocation4], 0
    %9 = vsyncpa [#allocation7], 0
    %10 = vsyncpa [#allocation5], 0
    // Predicated region
    $region2: #{tpu_custom_call.1} parent=1 // pred_check
      _
    $region3: #{tpu_custom_call.1} parent=1 // pred_check_branch
      %12 = sbr.rel (0) target = $region5
    $region4: #{tpu_custom_call.1} parent=1 // pred_region
      %14 = vsyncadd [#allocation4], 0
      %s15 = sshll.u32 %s0, 4
      %s16 = int_to_ptr.hbm [resolvable:$true] %s15
      %s17 = sshll.u32 [#allocation3], 4
      %s18 = int_to_ptr.vmem [resolvable:$true] %s17
      %23 = dma.hbm_to_vmem [thread:$0]  %s16, 256, %s18, [#allocation4], 128, 128, 8
    $region5: #{tpu_custom_call.1} parent=1 // pred_fallthru
      _
    // Predicated region
    $region6: #{tpu_custom_call.1} parent=1 // pred_check
      _
    $region7: #{tpu_custom_call.1} parent=1 // pred_check_branch
      %25 = sbr.rel (0) target = $region9
    $region8: #{tpu_custom_call.1} parent=1 // pred_region
      %27 = vsyncadd [#allocation7], 0
      %s28 = sshll.u32 %s1, 4
      %s29 = int_to_ptr.hbm [resolvable:$true] %s28
      %s30 = sshll.u32 [#allocation6], 4
      %s31 = int_to_ptr.vmem [resolvable:$true] %s30
      %36 = dma.hbm_to_vmem [thread:$0]  %s29, 512, %s31, [#allocation7], 128, 128, 8
    $region9: #{tpu_custom_call.1} parent=1 // pred_fallthru
      _
    // Predicated region
    $region10: #{tpu_custom_call.1} parent=1 // pred_check
      _
    $region11: #{tpu_custom_call.1} parent=1 // pred_check_branch
      %38 = sbr.rel (0) target = $region13
    $region12: #{tpu_custom_call.1} parent=1 // pred_region
      _
    $region13: #{tpu_custom_call.1} parent=1 // pred_fallthru
      _
    // Predicated region
    $region14: #{tpu_custom_call.1} parent=1 // pred_check
      _
    $region15: #{tpu_custom_call.1} parent=1 // pred_check_branch
      %40 = sbr.rel (0) target = $region17
    $region16: #{tpu_custom_call.1} parent=1 // pred_region
      %42 = dma.done [#allocation4], 256
    $region17: #{tpu_custom_call.1} parent=1 // pred_fallthru
      _
    // Predicated region
    $region18: #{tpu_custom_call.1} parent=1 // pred_check
      _
    $region19: #{tpu_custom_call.1} parent=1 // pred_check_branch
      %44 = sbr.rel (0) target = $region21
    $region20: #{tpu_custom_call.1} parent=1 // pred_region
      %46 = dma.done [#allocation7], 512
    $region21: #{tpu_custom_call.1} parent=1 // pred_fallthru
      _
    %p47 = scmp.eq.s32.totalorder 0, 0
    // Predicated region
    $region22: #{tpu_custom_call.1} parent=1 // pred_check
      %p48 = pneg %p47
    $region23: #{tpu_custom_call.1} parent=1 // pred_check_branch
      %50 = sbr.rel (%p48) target = $region25
    $region24: #{tpu_custom_call.1} parent=1 // pred_region
      %vm51 = vcmask 785408
      %52 = vst.msk [vmem:[#allocation2] sm:$0xff] %vm51, 0.0
      %53 = vst.msk [vmem:[#allocation2 + $0x8] sm:$0xff] %vm51, 0.0
    $region25: #{tpu_custom_call.1} parent=1 // pred_fallthru
      _
    %v54 = vld [vmem:[#allocation2] sm:$0xff]
    %v55 = vld [vmem:[#allocation2 + $0x8] sm:$0xff]
    %v56 = vld [vmem:[#allocation3] sm:$0xff]
    %v57 = vld [vmem:[#allocation3 + $0x8] sm:$0xff]
    %v58 = vld [vmem:[#allocation6] sm:$0xff]
    %v59 = vld [vmem:[#allocation6 + $0x8] sm:$0xff]
    %v60 = vld [vmem:[#allocation6 + $0x10] sm:$0xff]
    %v61 = vld [vmem:[#allocation6 + $0x18] sm:$0xff]
    %vm62 = vcmask 261120
    %v64 = vsel %vm62, %v56, 0
    %v67 = vsel %vm62, %v57, 0
    %69 = vmatpush.msra.mxu0 0.0
    %70 = vmatpush.msra.mxu0 0.0
    %71 = vmatpush.msra.mxu0 0.0
    %72 = vmatpush.msra.mxu0 0.0
    %73 = vmatpush.msra.mxu0 0.0
    %74 = vmatpush.msra.mxu0 0.0
    %75 = vmatpush.msra.mxu0 0.0
    %76 = vmatpush.msra.mxu0 0.0
    %77 = vmatpush.msra.mxu0 0.0
    %78 = vmatpush.msra.mxu0 0.0
    %79 = vmatpush.msra.mxu0 0.0
    %80 = vmatpush.msra.mxu0 0.0
    %81 = vmatpush.msra.mxu0 %v61
    %82 = vmatpush.msra.mxu0 %v60
    %83 = vmatpush.msra.mxu0 %v59
    %84 = vmatpush.msra.mxu0 %v58
    %85 = vmatmul.f32.gmra.mxu0 %v64
    %v86 = vpop.f32.mrf.mxu0
    %v87 = vadd.f32 0.0, %v86
    %88 = vmatmul.f32.gmra.mxu0 %v67
    %v89 = vpop.f32.mrf.mxu0
    %v90 = vadd.f32 0.0, %v89
    %91 = vdwg.mxu0
    %v92 = vadd.f32 %v54, %v87
    %v93 = vadd.f32 %v55, %v90
    %vm94 = vcmask 785408
    %95 = vst.msk [vmem:[#allocation2] sm:$0xff] %vm94, %v92
    %96 = vst.msk [vmem:[#allocation2 + $0x8] sm:$0xff] %vm94, %v93
    // Predicated region
    $region26: #{tpu_custom_call.1} parent=1 // pred_check
      %p97 = pneg %p47
    $region27: #{tpu_custom_call.1} parent=1 // pred_check_branch
      %99 = sbr.rel (%p97) target = $region29
    $region28: #{tpu_custom_call.1} parent=1 // pred_region
      %v100 = vld [vmem:[#allocation2] sm:$0xff]
      %v101 = vld [vmem:[#allocation2 + $0x8] sm:$0xff]
      %v102 = vld [vmem:[%s2] sm:$0x1]
      %v104 = vperm.slane %v102, 0
      %v106 = vadd.f32 %v100, %v104
      %v107 = vadd.f32 %v101, %v104
      %108 = vst.msk [vmem:[#allocation8] sm:$0xff] %vm94, %v106
      %109 = vst.msk [vmem:[#allocation8 + $0x8] sm:$0xff] %vm94, %v107
    $region29: #{tpu_custom_call.1} parent=1 // pred_fallthru
      _
    // Predicated region
    $region30: #{tpu_custom_call.1} parent=1 // pred_check
      _
    $region31: #{tpu_custom_call.1} parent=1 // pred_check_branch
      %111 = sbr.rel (0) target = $region33
    $region32: #{tpu_custom_call.1} parent=1 // pred_region
      %113 = vsyncadd [#allocation5], 0
      %s114 = sshll.u32 [#allocation8], 4
      %s115 = int_to_ptr.vmem [resolvable:$true] %s114
      %s116 = sshll.u32 %s3, 4
      %s117 = int_to_ptr.hbm [resolvable:$true] %s116
      %122 = dma.vmem_to_hbm [thread:$0]  %s115, 256, %s117, [#allocation5], 128, 128, 8
    $region33: #{tpu_custom_call.1} parent=1 // pred_fallthru
      _
    // Predicated region
    $region34: #{tpu_custom_call.1} parent=1 // pred_check
      _
    $region35: #{tpu_custom_call.1} parent=1 // pred_check_branch
      %124 = sbr.rel (0) target = $region37
    $region36: #{tpu_custom_call.1} parent=1 // pred_region
      %126 = dma.done [#allocation5], 256
    $region37: #{tpu_custom_call.1} parent=1 // pred_fallthru
      _
    %127 = vsyncpa [#allocation4], 1
    %128 = vsyncpa [#allocation7], 1
    %129 = vsyncpa [#allocation5], 1

</llo_original>
